<compile_context>
chip_gen: v5e
topology: v5e:2x2
jax: 0.10.0
libtpu: 0.0.40
codegen_flags: <defaults>
</compile_context>

<pallas_src>
import jax
import jax.numpy as jnp
from jax import lax
from jax.experimental import pallas as pl
from jax.experimental.pallas import tpu as pltpu


def _round_up(x, m):
    return ((x + m - 1) // m) * m


# Conservative resident-output budget (v7x has 64 MiB VMEM per TC; leave room
# for double-buffered inputs and compiler scratch).
_VMEM_RESIDENT_BUDGET = 24 * 1024 * 1024


# --------------------------------------------------------------------------
# Fused path: conv matmul + BN stats + normalize + ReLU in ONE pallas_call.
# --------------------------------------------------------------------------
def fused_conv_bn_relu(patches, w_mat, gamma, beta, *, true_m, tm, eps):
    Mp, K = patches.shape
    _, C = w_mat.shape
    n_tiles = Mp // tm
    inv_m = 1.0 / float(true_m)

    def kernel(x_ref, w_ref, g_ref, b_ref, o_ref, stats_ref):
        i = pl.program_id(0)

        @pl.when(i == 0)
        def _():
            stats_ref[...] = jnp.zeros_like(stats_ref)

        # Conv tile on the MXU.  K and C kept at their true (unpadded) sizes.
        y = jnp.dot(x_ref[...], w_ref[...], preferred_element_type=jnp.float32)

        # Write this tile into the VMEM-resident output block.
        row0 = pl.multiple_of(i * tm, tm)
        o_ref[pl.ds(row0, tm), :] = y

        # Per-channel batch statistics: two row-slice accumulates (no concat).
        stats_ref[0:1, :] += jnp.sum(y, axis=0, keepdims=True)
        stats_ref[1:2, :] += jnp.sum(y * y, axis=0, keepdims=True)

        @pl.when(i == n_tiles - 1)
        def _():
            # scale/shift computed on-chip; rsqrt lands on the EUP slot.
            mean = stats_ref[0:1, :] * inv_m
            var = stats_ref[1:2, :] * inv_m - mean * mean
            scale = g_ref[...] * lax.rsqrt(var + eps)
            shift = b_ref[...] - mean * scale
            o_ref[...] = jnp.maximum(o_ref[...] * scale + shift, 0.0)

    return pl.pallas_call(
        kernel,
        out_shape=jax.ShapeDtypeStruct((Mp, C), jnp.float32),
        grid_spec=pltpu.PrefetchScalarGridSpec(
            num_scalar_prefetch=0,
            grid=(n_tiles,),
            in_specs=[
                pl.BlockSpec((tm, K), lambda i: (i, 0)),
                pl.BlockSpec((K, C), lambda i: (0, 0)),
                pl.BlockSpec((1, C), lambda i: (0, 0)),
                pl.BlockSpec((1, C), lambda i: (0, 0)),
            ],
            # Constant output block index -> output stays resident in VMEM
            # across the whole grid and is written to HBM exactly once.
            out_specs=pl.BlockSpec((Mp, C), lambda i: (0, 0)),
            scratch_shapes=[pltpu.VMEM((2, C), jnp.float32)],
        ),
        compiler_params=pltpu.CompilerParams(
            # Stats + resident output accumulate across the M axis.
            dimension_semantics=("arbitrary",),
            vmem_limit_bytes=64 * 1024 * 1024,
        ),
    )(patches, w_mat, gamma.reshape(1, C), beta.reshape(1, C))


# --------------------------------------------------------------------------
# Fallback path for large M: conv+stats kernel, then aliased normalize kernel.
# --------------------------------------------------------------------------
def conv_stats(patches, w_mat, *, tm):
    Mp, K = patches.shape
    _, C = w_mat.shape

    def kernel(x_ref, w_ref, o_ref, stats_ref):
        @pl.when(pl.program_id(0) == 0)
        def _():
            stats_ref[...] = jnp.zeros_like(stats_ref)

        y = jnp.dot(x_ref[...], w_ref[...], preferred_element_type=jnp.float32)
        o_ref[...] = y
        stats_ref[0:1, :] += jnp.sum(y, axis=0, keepdims=True)
        stats_ref[1:2, :] += jnp.sum(y * y, axis=0, keepdims=True)

    return pl.pallas_call(
        kernel,
        out_shape=(jax.ShapeDtypeStruct((Mp, C), jnp.float32),
                   jax.ShapeDtypeStruct((2, C), jnp.float32)),
        grid_spec=pltpu.PrefetchScalarGridSpec(
            num_scalar_prefetch=0,
            grid=(Mp // tm,),
            in_specs=[pl.BlockSpec((tm, K), lambda i: (i, 0)),
                      pl.BlockSpec((K, C), lambda i: (0, 0))],
            out_specs=(pl.BlockSpec((tm, C), lambda i: (i, 0)),
                       pl.BlockSpec((2, C), lambda i: (0, 0)))),
        compiler_params=pltpu.CompilerParams(
            dimension_semantics=("arbitrary",),
            vmem_limit_bytes=64 * 1024 * 1024),
    )(patches, w_mat)


def bn_relu(conv, stats, gamma, beta, *, true_m, tm, eps):
    Mp, C = conv.shape
    inv_m = 1.0 / float(true_m)

    def kernel(x_ref, s_ref, g_ref, b_ref, o_ref):
        mean = s_ref[0:1, :] * inv_m
        var = s_ref[1:2, :] * inv_m - mean * mean
        scale = g_ref[...] * lax.rsqrt(var + eps)
        shift = b_ref[...] - mean * scale
        o_ref[...] = jnp.maximum(x_ref[...] * scale + shift, 0.0)

    return pl.pallas_call(
        kernel,
        out_shape=jax.ShapeDtypeStruct((Mp, C), jnp.float32),
        grid_spec=pltpu.PrefetchScalarGridSpec(
            num_scalar_prefetch=0,
            grid=(Mp // tm,),
            in_specs=[pl.BlockSpec((tm, C), lambda i: (i, 0)),
                      pl.BlockSpec((2, C), lambda i: (0, 0)),
                      pl.BlockSpec((1, C), lambda i: (0, 0)),
                      pl.BlockSpec((1, C), lambda i: (0, 0))],
            out_specs=pl.BlockSpec((tm, C), lambda i: (i, 0))),
        input_output_aliases={0: 0},   # write activation in place of conv
        compiler_params=pltpu.CompilerParams(
            dimension_semantics=("parallel",),
            vmem_limit_bytes=64 * 1024 * 1024),
    )(conv, stats, gamma.reshape(1, C), beta.reshape(1, C))


# ------------------------------ glue (im2col) -------------------------------
def _im2col_3x3(x_nhwc):
    """3x3 patches with padding=1 -> (N*H*W, 9*C), rows in NHWC pixel order."""
    N, H, W, C = x_nhwc.shape
    xp = jnp.pad(x_nhwc, ((0, 0), (1, 1), (1, 1), (0, 0)))
    cols = [xp[:, i:i + H, j:j + W, :] for i in range(3) for j in range(3)]
    patches = jnp.stack(cols, axis=3)               # (N, H, W, 9, C)
    return patches.reshape(N * H * W, 9 * C)


# ------------------------------- DownBlock -----------------------------------
def down_block_forward(params, x_nchw, *, eps=1e-5, tm=512):
    wc = params["wc"]                                # (Cout, Cin, 3, 3)
    Cout, Cin = wc.shape[0], wc.shape[1]
    N, _, H, W = x_nchw.shape
    M, K = N * H * W, 9 * Cin

    tm = min(tm, _round_up(M, 8))
    Mp = _round_up(M, tm)

    x_nhwc = jnp.transpose(x_nchw, (0, 2, 3, 1))
    patches = _im2col_3x3(x_nhwc)
    if Mp != M:
        patches = jnp.pad(patches, ((0, Mp - M), (0, 0)))

    # weight matrix ordered (kh, kw, Cin) x Cout to match the patch layout.
    w_mat = jnp.transpose(wc, (2, 3, 1, 0)).reshape(K, Cout)
    # Conv bias omitted: training-mode BN's mean subtraction cancels it.

    gamma, beta = params["gamma"], params["beta"]

    if 2 * Mp * Cout * 4 <= _VMEM_RESIDENT_BUDGET:
        act = fused_conv_bn_relu(patches, w_mat, gamma, beta,
                                 true_m=M, tm=tm, eps=eps)
    else:
        conv, stats = conv_stats(patches, w_mat, tm=tm)
        act = bn_relu(conv, stats, gamma, beta, true_m=M, tm=tm, eps=eps)

    if Mp != M:
        act = act[:M]
    out = act.reshape(N, H, W, Cout)
    return jnp.transpose(out, (0, 3, 1, 2))          # back to NCHW


# ---------------------------- pure-JAX reference ----------------------------
def reference_forward(params, x, eps=1e-5):
    conv = lax.conv_general_dilated(x, params["wc"], (1, 1), [(1, 1), (1, 1)],
                                    dimension_numbers=("NCHW", "OIHW", "NCHW"))
    conv = conv + params["bc"].reshape(1, -1, 1, 1)
    mean = jnp.mean(conv, axis=(0, 2, 3), keepdims=True)
    var = jnp.mean(jnp.square(conv - mean), axis=(0, 2, 3), keepdims=True)
    y = (conv - mean) * lax.rsqrt(var + eps)
    y = y * params["gamma"].reshape(1, -1, 1, 1) + params["beta"].reshape(1, -1, 1, 1)
    return jnp.maximum(y, 0.0)


# --------------------------------- main --------------------------------------
if __name__ == "__main__":
    N, Cin, Cout, H, W = 2, 4, 8, 16, 16

    key = jax.random.PRNGKey(0)
    k1, k2, k3, k4, k5 = jax.random.split(key, 5)

    params = {
        # Conv2d(Cin, Cout, 3, padding=1)
        "wc": 0.1 * jax.random.normal(k1, (Cout, Cin, 3, 3), jnp.float32),
        "bc": 0.1 * jax.random.normal(k2, (Cout,), jnp.float32),
        # BatchNorm2d(Cout) with non-trivial affine params
        "gamma": 1.0 + 0.1 * jax.random.normal(k3, (Cout,), jnp.float32),
        "beta": 0.1 * jax.random.normal(k4, (Cout,), jnp.float32),
    }

    input_img = jax.random.normal(k5, (N, Cin, H, W), jnp.float32)

    fwd = jax.jit(down_block_forward)
    out = jax.block_until_ready(fwd(params, input_img))
    ref = jax.block_until_ready(reference_forward(params, input_img))

    assert out.shape == (N, Cout, H, W), out.shape
    err = float(jnp.max(jnp.abs(out - ref)))
    assert err < 1e-4, err

    print("KERNEL_OK")
</pallas_src>

<mosaic_0001>
module attributes {stable_mosaic.version = 11 : i64} {
  func.func @kernel(%arg0: i32, %arg1: memref<512x36xf32, #tpu.memory_space<vmem>>, %arg2: memref<36x8xf32, #tpu.memory_space<vmem>>, %arg3: memref<1x8xf32, #tpu.memory_space<vmem>>, %arg4: memref<1x8xf32, #tpu.memory_space<vmem>>, %arg5: memref<512x8xf32, #tpu.memory_space<vmem>>, %arg6: memref<2x8xf32, #tpu.memory_space<vmem>>) attributes {dimension_semantics = [#tpu.dimension_semantics<arbitrary>], iteration_bounds = array<i64: 1>, scalar_prefetch = 0 : i64, scratch_operands = 1 : i64, tpu.core_type = #tpu.core_type<tc>, window_params = [{transform_indices = @transform_0, window_bounds = array<i64: 512, 36>}, {pipeline_mode = #tpu.pipeline_mode<synchronous>, transform_indices = @transform_1, window_bounds = array<i64: 36, 8>}, {pipeline_mode = #tpu.pipeline_mode<synchronous>, transform_indices = @transform_2, window_bounds = array<i64: 1, 8>}, {pipeline_mode = #tpu.pipeline_mode<synchronous>, transform_indices = @transform_3, window_bounds = array<i64: 1, 8>}, {pipeline_mode = #tpu.pipeline_mode<synchronous>, transform_indices = @transform_4, window_bounds = array<i64: 512, 8>}]} {
    %c0_i32 = arith.constant 0 : i32
    %0 = arith.cmpi eq, %arg0, %c0_i32 : i32
    %1 = arith.extui %0 : i1 to i32
    %c0_i32_0 = arith.constant 0 : i32
    %2 = arith.cmpi ne, %1, %c0_i32_0 : i32
    scf.if %2 {
      %cst_16 = arith.constant 0.000000e+00 : f32
      %24 = vector.broadcast %cst_16 : f32 to vector<2x8xf32>
      %c0_17 = arith.constant 0 : index
      %c0_18 = arith.constant 0 : index
      %25 = vector.load %arg6[%c0_17, %c0_18] : memref<2x8xf32, #tpu.memory_space<vmem>>, vector<2x8xf32>
      tpu.vector_store %arg6[%c0_17, %c0_18], %24 {strides = array<i32>} : memref<2x8xf32, #tpu.memory_space<vmem>>, vector<2x8xf32>,
    } else {
    }
    %c0 = arith.constant 0 : index
    %c0_1 = arith.constant 0 : index
    %3 = vector.load %arg1[%c0, %c0_1] : memref<512x36xf32, #tpu.memory_space<vmem>>, vector<512x36xf32>
    %c0_2 = arith.constant 0 : index
    %c0_3 = arith.constant 0 : index
    %4 = vector.load %arg2[%c0_2, %c0_3] : memref<36x8xf32, #tpu.memory_space<vmem>>, vector<36x8xf32>
    %cst = arith.constant dense<0.000000e+00> : vector<512x8xf32>
    %5 = tpu.matmul %3, %4, %cst {dimension_numbers = #tpu.dot_dimension_numbers<[1], [0], [0], [1], [0, 0, 1, 1], [], []>} : vector<512x36xf32>, vector<36x8xf32>, vector<512x8xf32> -> vector<512x8xf32>
    %c512_i32 = arith.constant 512 : i32
    %6 = arith.muli %arg0, %c512_i32 : i32
    %7 = tpu.assume_multiple %6, 512 : i32
    %8 = arith.index_cast %7 : i32 to index
    %c0_4 = arith.constant 0 : index
    %9 = vector.load %arg5[%8, %c0_4] : memref<512x8xf32, #tpu.memory_space<vmem>>, vector<512x8xf32>
    tpu.vector_store %arg5[%8, %c0_4], %5 {strides = array<i32>} : memref<512x8xf32, #tpu.memory_space<vmem>>, vector<512x8xf32>,
    %c0_5 = arith.constant 0 : index
    %c0_6 = arith.constant 0 : index
    %10 = vector.load %arg6[%c0_5, %c0_6] : memref<2x8xf32, #tpu.memory_space<vmem>>, vector<1x8xf32>
    %cst_7 = arith.constant dense<0.000000e+00> : vector<8xf32>
    %11 = vector.multi_reduction <add>, %5, %cst_7 [0] : vector<512x8xf32> to vector<8xf32>
    %12 = vector.shape_cast %11 : vector<8xf32> to vector<1x8xf32>
    %13 = arith.addf %10, %12 : vector<1x8xf32>
    %c0_8 = arith.constant 0 : index
    %c0_9 = arith.constant 0 : index
    %14 = vector.load %arg6[%c0_8, %c0_9] : memref<2x8xf32, #tpu.memory_space<vmem>>, vector<1x8xf32>
    tpu.vector_store %arg6[%c0_8, %c0_9], %13 {strides = array<i32>} : memref<2x8xf32, #tpu.memory_space<vmem>>, vector<1x8xf32>,
    %c1 = arith.constant 1 : index
    %c0_10 = arith.constant 0 : index
    %15 = vector.load %arg6[%c1, %c0_10] : memref<2x8xf32, #tpu.memory_space<vmem>>, vector<1x8xf32>
    %16 = arith.mulf %5, %5 : vector<512x8xf32>
    %cst_11 = arith.constant dense<0.000000e+00> : vector<8xf32>
    %17 = vector.multi_reduction <add>, %16, %cst_11 [0] : vector<512x8xf32> to vector<8xf32>
    %18 = vector.shape_cast %17 : vector<8xf32> to vector<1x8xf32>
    %19 = arith.addf %15, %18 : vector<1x8xf32>
    %c1_12 = arith.constant 1 : index
    %c0_13 = arith.constant 0 : index
    %20 = vector.load %arg6[%c1_12, %c0_13] : memref<2x8xf32, #tpu.memory_space<vmem>>, vector<1x8xf32>
    tpu.vector_store %arg6[%c1_12, %c0_13], %19 {strides = array<i32>} : memref<2x8xf32, #tpu.memory_space<vmem>>, vector<1x8xf32>,
    %c0_i32_14 = arith.constant 0 : i32
    %21 = arith.cmpi eq, %arg0, %c0_i32_14 : i32
    %22 = arith.extui %21 : i1 to i32
    %c0_i32_15 = arith.constant 0 : i32
    %23 = arith.cmpi ne, %22, %c0_i32_15 : i32
    scf.if %23 {
      %c0_16 = arith.constant 0 : index
      %c0_17 = arith.constant 0 : index
      %24 = vector.load %arg6[%c0_16, %c0_17] : memref<2x8xf32, #tpu.memory_space<vmem>>, vector<1x8xf32>
      %cst_18 = arith.constant 0.001953125 : f32
      %25 = vector.broadcast %cst_18 : f32 to vector<1x8xf32>
      %26 = arith.mulf %24, %25 : vector<1x8xf32>
      %c1_19 = arith.constant 1 : index
      %c0_20 = arith.constant 0 : index
      %27 = vector.load %arg6[%c1_19, %c0_20] : memref<2x8xf32, #tpu.memory_space<vmem>>, vector<1x8xf32>
      %cst_21 = arith.constant 0.001953125 : f32
      %28 = vector.broadcast %cst_21 : f32 to vector<1x8xf32>
      %29 = arith.mulf %27, %28 : vector<1x8xf32>
      %30 = arith.mulf %26, %26 : vector<1x8xf32>
      %31 = arith.subf %29, %30 : vector<1x8xf32>
      %c0_22 = arith.constant 0 : index
      %c0_23 = arith.constant 0 : index
      %32 = vector.load %arg3[%c0_22, %c0_23] : memref<1x8xf32, #tpu.memory_space<vmem>>, vector<1x8xf32>
      %cst_24 = arith.constant 9.99999974E-6 : f32
      %33 = vector.broadcast %cst_24 : f32 to vector<1x8xf32>
      %34 = arith.addf %31, %33 : vector<1x8xf32>
      %35 = math.rsqrt %34 : vector<1x8xf32>
      %36 = arith.mulf %32, %35 : vector<1x8xf32>
      %c0_25 = arith.constant 0 : index
      %c0_26 = arith.constant 0 : index
      %37 = vector.load %arg4[%c0_25, %c0_26] : memref<1x8xf32, #tpu.memory_space<vmem>>, vector<1x8xf32>
      %38 = arith.mulf %26, %36 : vector<1x8xf32>
      %39 = arith.subf %37, %38 : vector<1x8xf32>
      %c0_27 = arith.constant 0 : index
      %c0_28 = arith.constant 0 : index
      %40 = vector.load %arg5[%c0_27, %c0_28] : memref<512x8xf32, #tpu.memory_space<vmem>>, vector<512x8xf32>
      %41 = vector.broadcast %36 : vector<1x8xf32> to vector<512x8xf32>
      %42 = arith.mulf %40, %41 : vector<512x8xf32>
      %43 = vector.broadcast %39 : vector<1x8xf32> to vector<512x8xf32>
      %44 = arith.addf %42, %43 : vector<512x8xf32>
      %cst_29 = arith.constant 0.000000e+00 : f32
      %45 = vector.broadcast %cst_29 : f32 to vector<512x8xf32>
      %46 = arith.maximumf %44, %45 : vector<512x8xf32>
      %c0_30 = arith.constant 0 : index
      %c0_31 = arith.constant 0 : index
      %47 = vector.load %arg5[%c0_30, %c0_31] : memref<512x8xf32, #tpu.memory_space<vmem>>, vector<512x8xf32>
      tpu.vector_store %arg5[%c0_30, %c0_31], %46 {strides = array<i32>} : memref<512x8xf32, #tpu.memory_space<vmem>>, vector<512x8xf32>,
    } else {
    }
    return
  }
  func.func @transform_0(%arg0: i32) -> (i32, i32) {
    %c0_i32 = arith.constant 0 : i32
    %c0_i32_0 = arith.constant 0 : i32
    return %arg0, %c0_i32 : i32, i32
  }
  func.func @transform_1(%arg0: i32) -> (i32, i32) {
    %c0_i32 = arith.constant 0 : i32
    %c0_i32_0 = arith.constant 0 : i32
    %c0_i32_1 = arith.constant 0 : i32
    return %c0_i32, %c0_i32_0 : i32, i32
  }
  func.func @transform_2(%arg0: i32) -> (i32, i32) {
    %c0_i32 = arith.constant 0 : i32
    %c0_i32_0 = arith.constant 0 : i32
    %c0_i32_1 = arith.constant 0 : i32
    return %c0_i32, %c0_i32_0 : i32, i32
  }
  func.func @transform_3(%arg0: i32) -> (i32, i32) {
    %c0_i32 = arith.constant 0 : i32
    %c0_i32_0 = arith.constant 0 : i32
    %c0_i32_1 = arith.constant 0 : i32
    return %c0_i32, %c0_i32_0 : i32, i32
  }
  func.func @transform_4(%arg0: i32) -> (i32, i32) {
    %c0_i32 = arith.constant 0 : i32
    %c0_i32_0 = arith.constant 0 : i32
    %c0_i32_1 = arith.constant 0 : i32
    return %c0_i32, %c0_i32_0 : i32, i32
  }
}

</mosaic_0001>

<llo_original>
// kernel: down_block_forward.1
$region0: #{down_block_forward.1}
  #allocation0 [shape = 'u32[]', space=smem, size = 0x4, offset = 0x4, fixed_abs, tag = 'smem constant byte address 0x4 - core index']
  #allocation1 [shape = 'u32[72,128]{1,0:T(1,128)}', space=vmem, size = 0x9000, scoped, tag = 'internal scratch']
  #allocation2 [shape = 'f32[2,8]{1,0:T(2,128)}', space=vmem, size = 0x400, scoped, tag = 'scratch operand']
  %s0 = inlined_call_operand.vmem [shape: f32[512,36], index: 0, kind: input, shape index: {}]
  %s1 = inlined_call_operand.vmem [shape: f32[36,8], index: 1, kind: input, shape index: {}]
  %s2 = inlined_call_operand.vmem [shape: f32[1,8], index: 2, kind: input, shape index: {}]
  %s3 = inlined_call_operand.vmem [shape: f32[1,8], index: 3, kind: input, shape index: {}]
  %s4 = inlined_call_operand.vmem [shape: f32[512,8], index: 4, kind: output, shape index: {}]
  %s5 = sld [smem:[#allocation0]]
  $region34: #{down_block_forward.1} parent=0
    _
  %s7 = ssub.s32 1, %s5
  %s8 = scalar_select 0, %s7, %s5
  // Predicated region
  $region2: #{down_block_forward.1} parent=0 // pred_check
    _
  $region3: #{down_block_forward.1} parent=0 // pred_check_branch
    %10 = sbr.rel (0) target = $region5
  $region4: #{down_block_forward.1} parent=0 // pred_region
    _
  $region5: #{down_block_forward.1} parent=0 // pred_fallthru
    _
  // Predicated region
  $region6: #{down_block_forward.1} parent=0 // pred_check
    _
  $region7: #{down_block_forward.1} parent=0 // pred_check_branch
    %12 = sbr.rel (0) target = $region9
  $region8: #{down_block_forward.1} parent=0 // pred_region
    _
  $region9: #{down_block_forward.1} parent=0 // pred_fallthru
    _
  // Predicated region
  $region10: #{down_block_forward.1} parent=0 // pred_check
    _
  $region11: #{down_block_forward.1} parent=0 // pred_check_branch
    %14 = sbr.rel (0) target = $region13
  $region12: #{down_block_forward.1} parent=0 // pred_region
    _
  $region13: #{down_block_forward.1} parent=0 // pred_fallthru
    _
  // Predicated region
  $region14: #{down_block_forward.1} parent=0 // pred_check
    _
  $region15: #{down_block_forward.1} parent=0 // pred_check_branch
    %16 = sbr.rel (0) target = $region17
  $region16: #{down_block_forward.1} parent=0 // pred_region
    _
  $region17: #{down_block_forward.1} parent=0 // pred_fallthru
    _
  %p17 = scmp.eq.s32.totalorder 0, 0
  // Predicated region
  $region18: #{down_block_forward.1} parent=0 // pred_check
    %p18 = pneg %p17
  $region19: #{down_block_forward.1} parent=0 // pred_check_branch
    %20 = sbr.rel (%p18) target = $region21
  $region20: #{down_block_forward.1} parent=0 // pred_region
    %vm21 = vcmask 58368
    %22 = vst.msk [vmem:[#allocation2] sm:$0x3] %vm21, 0.0
  $region21: #{down_block_forward.1} parent=0 // pred_fallthru
    _
  %v23 = vld [vmem:[%s0] sm:$0xff]
  %v24 = vld [vmem:[%s0 + $0x8] sm:$0xff]
  %v25 = vld [vmem:[%s0 + $0x10] sm:$0xff]
  %v26 = vld [vmem:[%s0 + $0x18] sm:$0xff]
  %v27 = vld [vmem:[%s0 + $0x20] sm:$0xff]
  %v28 = vld [vmem:[%s0 + $0x28] sm:$0xff]
  %v29 = vld [vmem:[%s0 + $0x30] sm:$0xff]
  %v30 = vld [vmem:[%s0 + $0x38] sm:$0xff]
  %v31 = vld [vmem:[%s0 + $0x40] sm:$0xff]
  %v32 = vld [vmem:[%s0 + $0x48] sm:$0xff]
  %v33 = vld [vmem:[%s0 + $0x50] sm:$0xff]
  %v34 = vld [vmem:[%s0 + $0x58] sm:$0xff]
  %v35 = vld [vmem:[%s0 + $0x60] sm:$0xff]
  %v36 = vld [vmem:[%s0 + $0x68] sm:$0xff]
  %v37 = vld [vmem:[%s0 + $0x70] sm:$0xff]
  %v38 = vld [vmem:[%s0 + $0x78] sm:$0xff]
  %v39 = vld [vmem:[%s0 + $0x80] sm:$0xff]
  %v40 = vld [vmem:[%s0 + $0x88] sm:$0xff]
  %v41 = vld [vmem:[%s0 + $0x90] sm:$0xff]
  %v42 = vld [vmem:[%s0 + $0x98] sm:$0xff]
  %v43 = vld [vmem:[%s0 + $0xa0] sm:$0xff]
  %v44 = vld [vmem:[%s0 + $0xa8] sm:$0xff]
  %v45 = vld [vmem:[%s0 + $0xb0] sm:$0xff]
  %v46 = vld [vmem:[%s0 + $0xb8] sm:$0xff]
  %v47 = vld [vmem:[%s0 + $0xc0] sm:$0xff]
  %v48 = vld [vmem:[%s0 + $0xc8] sm:$0xff]
  %v49 = vld [vmem:[%s0 + $0xd0] sm:$0xff]
  %v50 = vld [vmem:[%s0 + $0xd8] sm:$0xff]
  %v51 = vld [vmem:[%s0 + $0xe0] sm:$0xff]
  %v52 = vld [vmem:[%s0 + $0xe8] sm:$0xff]
  %v53 = vld [vmem:[%s0 + $0xf0] sm:$0xff]
  %v54 = vld [vmem:[%s0 + $0xf8] sm:$0xff]
  %v55 = vld [vmem:[%s0 + $0x100] sm:$0xff]
  %v56 = vld [vmem:[%s0 + $0x108] sm:$0xff]
  %v57 = vld [vmem:[%s0 + $0x110] sm:$0xff]
  %v58 = vld [vmem:[%s0 + $0x118] sm:$0xff]
  %v59 = vld [vmem:[%s0 + $0x120] sm:$0xff]
  %v60 = vld [vmem:[%s0 + $0x128] sm:$0xff]
  %v61 = vld [vmem:[%s0 + $0x130] sm:$0xff]
  %v62 = vld [vmem:[%s0 + $0x138] sm:$0xff]
  %v63 = vld [vmem:[%s0 + $0x140] sm:$0xff]
  %v64 = vld [vmem:[%s0 + $0x148] sm:$0xff]
  %v65 = vld [vmem:[%s0 + $0x150] sm:$0xff]
  %v66 = vld [vmem:[%s0 + $0x158] sm:$0xff]
  %v67 = vld [vmem:[%s0 + $0x160] sm:$0xff]
  %v68 = vld [vmem:[%s0 + $0x168] sm:$0xff]
  %v69 = vld [vmem:[%s0 + $0x170] sm:$0xff]
  %v70 = vld [vmem:[%s0 + $0x178] sm:$0xff]
  %v71 = vld [vmem:[%s0 + $0x180] sm:$0xff]
  %v72 = vld [vmem:[%s0 + $0x188] sm:$0xff]
  %v73 = vld [vmem:[%s0 + $0x190] sm:$0xff]
  %v74 = vld [vmem:[%s0 + $0x198] sm:$0xff]
  %v75 = vld [vmem:[%s0 + $0x1a0] sm:$0xff]
  %v76 = vld [vmem:[%s0 + $0x1a8] sm:$0xff]
  %v77 = vld [vmem:[%s0 + $0x1b0] sm:$0xff]
  %v78 = vld [vmem:[%s0 + $0x1b8] sm:$0xff]
  %v79 = vld [vmem:[%s0 + $0x1c0] sm:$0xff]
  %v80 = vld [vmem:[%s0 + $0x1c8] sm:$0xff]
  %v81 = vld [vmem:[%s0 + $0x1d0] sm:$0xff]
  %v82 = vld [vmem:[%s0 + $0x1d8] sm:$0xff]
  %v83 = vld [vmem:[%s0 + $0x1e0] sm:$0xff]
  %v84 = vld [vmem:[%s0 + $0x1e8] sm:$0xff]
  %v85 = vld [vmem:[%s0 + $0x1f0] sm:$0xff]
  %v86 = vld [vmem:[%s0 + $0x1f8] sm:$0xff]
  %v87 = vld [vmem:[%s1] sm:$0xff]
  %v88 = vld [vmem:[%s1 + $0x8] sm:$0xff]
  %v89 = vld [vmem:[%s1 + $0x10] sm:$0xff]
  %v90 = vld [vmem:[%s1 + $0x18] sm:$0xff]
  %v91 = vld [vmem:[%s1 + $0x20] sm:$0xf]
  %vm92 = vcmask 293888
  %v94 = vsel %vm92, %v23, 0
  %v97 = vsel %vm92, %v24, 0
  %v100 = vsel %vm92, %v25, 0
  %v103 = vsel %vm92, %v26, 0
  %v106 = vsel %vm92, %v27, 0
  %v109 = vsel %vm92, %v28, 0
  %v112 = vsel %vm92, %v29, 0
  %v115 = vsel %vm92, %v30, 0
  %v118 = vsel %vm92, %v31, 0
  %v121 = vsel %vm92, %v32, 0
  %v124 = vsel %vm92, %v33, 0
  %v127 = vsel %vm92, %v34, 0
  %v130 = vsel %vm92, %v35, 0
  %v133 = vsel %vm92, %v36, 0
  %v136 = vsel %vm92, %v37, 0
  %v139 = vsel %vm92, %v38, 0
  %v142 = vsel %vm92, %v39, 0
  %v145 = vsel %vm92, %v40, 0
  %v148 = vsel %vm92, %v41, 0
  %v151 = vsel %vm92, %v42, 0
  %v154 = vsel %vm92, %v43, 0
  %v157 = vsel %vm92, %v44, 0
  %v160 = vsel %vm92, %v45, 0
  %v163 = vsel %vm92, %v46, 0
  %v166 = vsel %vm92, %v47, 0
  %v169 = vsel %vm92, %v48, 0
  %v172 = vsel %vm92, %v49, 0
  %v175 = vsel %vm92, %v50, 0
  %v178 = vsel %vm92, %v51, 0
  %v181 = vsel %vm92, %v52, 0
  %v184 = vsel %vm92, %v53, 0
  %v187 = vsel %vm92, %v54, 0
  %v190 = vsel %vm92, %v55, 0
  %v193 = vsel %vm92, %v56, 0
  %v196 = vsel %vm92, %v57, 0
  %v199 = vsel %vm92, %v58, 0
  %v202 = vsel %vm92, %v59, 0
  %v205 = vsel %vm92, %v60, 0
  %v208 = vsel %vm92, %v61, 0
  %v211 = vsel %vm92, %v62, 0
  %v214 = vsel %vm92, %v63, 0
  %v217 = vsel %vm92, %v64, 0
  %v220 = vsel %vm92, %v65, 0
  %v223 = vsel %vm92, %v66, 0
  %v226 = vsel %vm92, %v67, 0
  %v229 = vsel %vm92, %v68, 0
  %v232 = vsel %vm92, %v69, 0
  %v235 = vsel %vm92, %v70, 0
  %v238 = vsel %vm92, %v71, 0
  %v241 = vsel %vm92, %v72, 0
  %v244 = vsel %vm92, %v73, 0
  %v247 = vsel %vm92, %v74, 0
  %v250 = vsel %vm92, %v75, 0
  %v253 = vsel %vm92, %v76, 0
  %v256 = vsel %vm92, %v77, 0
  %v259 = vsel %vm92, %v78, 0
  %v262 = vsel %vm92, %v79, 0
  %v265 = vsel %vm92, %v80, 0
  %v268 = vsel %vm92, %v81, 0
  %v271 = vsel %vm92, %v82, 0
  %v274 = vsel %vm92, %v83, 0
  %v277 = vsel %vm92, %v84, 0
  %v280 = vsel %vm92, %v85, 0
  %v283 = vsel %vm92, %v86, 0
  %vm285 = vcmask 1043456
  %v287 = vsel %vm285, %v91, 0
  %289 = vmatpush.msra.mxu0 0.0
  %290 = vmatpush.msra.mxu0 0.0
  %291 = vmatpush.msra.mxu0 0.0
  %292 = vmatpush.msra.mxu0 0.0
  %293 = vmatpush.msra.mxu0 0.0
  %294 = vmatpush.msra.mxu0 0.0
  %295 = vmatpush.msra.mxu0 0.0
  %296 = vmatpush.msra.mxu0 0.0
  %297 = vmatpush.msra.mxu0 0.0
  %298 = vmatpush.msra.mxu0 0.0
  %299 = vmatpush.msra.mxu0 0.0
  %300 = vmatpush.msra.mxu0 %v287
  %301 = vmatpush.msra.mxu0 %v90
  %302 = vmatpush.msra.mxu0 %v89
  %303 = vmatpush.msra.mxu0 %v88
  %304 = vmatpush.msra.mxu0 %v87
  %305 = vmatmul.f32.gmra.mxu0 %v94
  %v306 = vpop.f32.mrf.mxu0
  %v307 = vadd.f32 0.0, %v306
  %308 = vmatmul.f32.gmra.mxu0 %v97
  %v309 = vpop.f32.mrf.mxu0
  %v310 = vadd.f32 0.0, %v309
  %311 = vmatmul.f32.gmra.mxu0 %v100
  %v312 = vpop.f32.mrf.mxu0
  %v313 = vadd.f32 0.0, %v312
  %314 = vmatmul.f32.gmra.mxu0 %v103
  %v315 = vpop.f32.mrf.mxu0
  %v316 = vadd.f32 0.0, %v315
  %317 = vmatmul.f32.gmra.mxu0 %v106
  %v318 = vpop.f32.mrf.mxu0
  %v319 = vadd.f32 0.0, %v318
  %320 = vmatmul.f32.gmra.mxu0 %v109
  %v321 = vpop.f32.mrf.mxu0
  %v322 = vadd.f32 0.0, %v321
  %323 = vmatmul.f32.gmra.mxu0 %v112
  %v324 = vpop.f32.mrf.mxu0
  %v325 = vadd.f32 0.0, %v324
  %326 = vmatmul.f32.gmra.mxu0 %v115
  %v327 = vpop.f32.mrf.mxu0
  %v328 = vadd.f32 0.0, %v327
  %329 = vmatmul.f32.gmra.mxu0 %v118
  %v330 = vpop.f32.mrf.mxu0
  %v331 = vadd.f32 0.0, %v330
  %332 = vmatmul.f32.gmra.mxu0 %v121
  %v333 = vpop.f32.mrf.mxu0
  %v334 = vadd.f32 0.0, %v333
  %335 = vmatmul.f32.gmra.mxu0 %v124
  %v336 = vpop.f32.mrf.mxu0
  %v337 = vadd.f32 0.0, %v336
  %338 = vmatmul.f32.gmra.mxu0 %v127
  %v339 = vpop.f32.mrf.mxu0
  %v340 = vadd.f32 0.0, %v339
  %341 = vmatmul.f32.gmra.mxu0 %v130
  %v342 = vpop.f32.mrf.mxu0
  %v343 = vadd.f32 0.0, %v342
  %344 = vmatmul.f32.gmra.mxu0 %v133
  %v345 = vpop.f32.mrf.mxu0
  %v346 = vadd.f32 0.0, %v345
  %347 = vmatmul.f32.gmra.mxu0 %v136
  %v348 = vpop.f32.mrf.mxu0
  %v349 = vadd.f32 0.0, %v348
  %350 = vmatmul.f32.gmra.mxu0 %v139
  %v351 = vpop.f32.mrf.mxu0
  %v352 = vadd.f32 0.0, %v351
  %353 = vmatmul.f32.gmra.mxu0 %v142
  %v354 = vpop.f32.mrf.mxu0
  %v355 = vadd.f32 0.0, %v354
  %356 = vmatmul.f32.gmra.mxu0 %v145
  %v357 = vpop.f32.mrf.mxu0
  %v358 = vadd.f32 0.0, %v357
  %359 = vmatmul.f32.gmra.mxu0 %v148
  %v360 = vpop.f32.mrf.mxu0
  %v361 = vadd.f32 0.0, %v360
  %362 = vmatmul.f32.gmra.mxu0 %v151
  %v363 = vpop.f32.mrf.mxu0
  %v364 = vadd.f32 0.0, %v363
  %365 = vmatmul.f32.gmra.mxu0 %v154
  %v366 = vpop.f32.mrf.mxu0
  %v367 = vadd.f32 0.0, %v366
  %368 = vmatmul.f32.gmra.mxu0 %v157
  %v369 = vpop.f32.mrf.mxu0
  %v370 = vadd.f32 0.0, %v369
  %371 = vmatmul.f32.gmra.mxu0 %v160
  %v372 = vpop.f32.mrf.mxu0
  %v373 = vadd.f32 0.0, %v372
  %374 = vmatmul.f32.gmra.mxu0 %v163
  %v375 = vpop.f32.mrf.mxu0
  %v376 = vadd.f32 0.0, %v375
  %377 = vmatmul.f32.gmra.mxu0 %v166
  %v378 = vpop.f32.mrf.mxu0
  %v379 = vadd.f32 0.0, %v378
  %380 = vmatmul.f32.gmra.mxu0 %v169
  %v381 = vpop.f32.mrf.mxu0
  %v382 = vadd.f32 0.0, %v381
  %383 = vmatmul.f32.gmra.mxu0 %v172
  %v384 = vpop.f32.mrf.mxu0
  %v385 = vadd.f32 0.0, %v384
  %386 = vmatmul.f32.gmra.mxu0 %v175
  %v387 = vpop.f32.mrf.mxu0
  %v388 = vadd.f32 0.0, %v387
  %389 = vmatmul.f32.gmra.mxu0 %v178
  %v390 = vpop.f32.mrf.mxu0
  %v391 = vadd.f32 0.0, %v390
  %392 = vmatmul.f32.gmra.mxu0 %v181
  %v393 = vpop.f32.mrf.mxu0
  %v394 = vadd.f32 0.0, %v393
  %395 = vmatmul.f32.gmra.mxu0 %v184
  %v396 = vpop.f32.mrf.mxu0
  %v397 = vadd.f32 0.0, %v396
  %398 = vmatmul.f32.gmra.mxu0 %v187
  %v399 = vpop.f32.mrf.mxu0
  %v400 = vadd.f32 0.0, %v399
  %401 = vmatmul.f32.gmra.mxu0 %v190
  %v402 = vpop.f32.mrf.mxu0
  %v403 = vadd.f32 0.0, %v402
  %404 = vmatmul.f32.gmra.mxu0 %v193
  %v405 = vpop.f32.mrf.mxu0
  %v406 = vadd.f32 0.0, %v405
  %407 = vmatmul.f32.gmra.mxu0 %v196
  %v408 = vpop.f32.mrf.mxu0
  %v409 = vadd.f32 0.0, %v408
  %410 = vmatmul.f32.gmra.mxu0 %v199
  %v411 = vpop.f32.mrf.mxu0
  %v412 = vadd.f32 0.0, %v411
  %413 = vmatmul.f32.gmra.mxu0 %v202
  %v414 = vpop.f32.mrf.mxu0
  %v415 = vadd.f32 0.0, %v414
  %416 = vmatmul.f32.gmra.mxu0 %v205
  %v417 = vpop.f32.mrf.mxu0
  %v418 = vadd.f32 0.0, %v417
  %419 = vmatmul.f32.gmra.mxu0 %v208
  %v420 = vpop.f32.mrf.mxu0
  %v421 = vadd.f32 0.0, %v420
  %422 = vmatmul.f32.gmra.mxu0 %v211
  %v423 = vpop.f32.mrf.mxu0
  %v424 = vadd.f32 0.0, %v423
  %425 = vmatmul.f32.gmra.mxu0 %v214
  %v426 = vpop.f32.mrf.mxu0
  %v427 = vadd.f32 0.0, %v426
  %428 = vmatmul.f32.gmra.mxu0 %v217
  %v429 = vpop.f32.mrf.mxu0
  %v430 = vadd.f32 0.0, %v429
  %431 = vmatmul.f32.gmra.mxu0 %v220
  %v432 = vpop.f32.mrf.mxu0
  %v433 = vadd.f32 0.0, %v432
  %434 = vmatmul.f32.gmra.mxu0 %v223
  %v435 = vpop.f32.mrf.mxu0
  %v436 = vadd.f32 0.0, %v435
  %437 = vmatmul.f32.gmra.mxu0 %v226
  %v438 = vpop.f32.mrf.mxu0
  %v439 = vadd.f32 0.0, %v438
  %440 = vmatmul.f32.gmra.mxu0 %v229
  %v441 = vpop.f32.mrf.mxu0
  %v442 = vadd.f32 0.0, %v441
  %443 = vmatmul.f32.gmra.mxu0 %v232
  %v444 = vpop.f32.mrf.mxu0
  %v445 = vadd.f32 0.0, %v444
  %446 = vmatmul.f32.gmra.mxu0 %v235
  %v447 = vpop.f32.mrf.mxu0
  %v448 = vadd.f32 0.0, %v447
  %449 = vmatmul.f32.gmra.mxu0 %v238
  %v450 = vpop.f32.mrf.mxu0
  %v451 = vadd.f32 0.0, %v450
  %452 = vmatmul.f32.gmra.mxu0 %v241
  %v453 = vpop.f32.mrf.mxu0
  %v454 = vadd.f32 0.0, %v453
  %455 = vmatmul.f32.gmra.mxu0 %v244
  %v456 = vpop.f32.mrf.mxu0
  %v457 = vadd.f32 0.0, %v456
  %458 = vmatmul.f32.gmra.mxu0 %v247
  %v459 = vpop.f32.mrf.mxu0
  %v460 = vadd.f32 0.0, %v459
  %461 = vmatmul.f32.gmra.mxu0 %v250
  %v462 = vpop.f32.mrf.mxu0
  %v463 = vadd.f32 0.0, %v462
  %464 = vmatmul.f32.gmra.mxu0 %v253
  %v465 = vpop.f32.mrf.mxu0
  %v466 = vadd.f32 0.0, %v465
  %467 = vmatmul.f32.gmra.mxu0 %v256
  %v468 = vpop.f32.mrf.mxu0
  %v469 = vadd.f32 0.0, %v468
  %470 = vmatmul.f32.gmra.mxu0 %v259
  %v471 = vpop.f32.mrf.mxu0
  %v472 = vadd.f32 0.0, %v471
  %473 = vmatmul.f32.gmra.mxu0 %v262
  %v474 = vpop.f32.mrf.mxu0
  %v475 = vadd.f32 0.0, %v474
  %476 = vmatmul.f32.gmra.mxu0 %v265
  %v477 = vpop.f32.mrf.mxu0
  %v478 = vadd.f32 0.0, %v477
  %479 = vmatmul.f32.gmra.mxu0 %v268
  %v480 = vpop.f32.mrf.mxu0
  %v481 = vadd.f32 0.0, %v480
  %482 = vmatmul.f32.gmra.mxu0 %v271
  %v483 = vpop.f32.mrf.mxu0
  %v484 = vadd.f32 0.0, %v483
  %485 = vmatmul.f32.gmra.mxu0 %v274
  %v486 = vpop.f32.mrf.mxu0
  %v487 = vadd.f32 0.0, %v486
  %488 = vmatmul.f32.gmra.mxu0 %v277
  %v489 = vpop.f32.mrf.mxu0
  %v490 = vadd.f32 0.0, %v489
  %491 = vmatmul.f32.gmra.mxu0 %v280
  %v492 = vpop.f32.mrf.mxu0
  %v493 = vadd.f32 0.0, %v492
  %494 = vmatmul.f32.gmra.mxu0 %v283
  %v495 = vpop.f32.mrf.mxu0
  %v496 = vadd.f32 0.0, %v495
  %497 = vdwg.mxu0
  %s498 = smul.u32 0, 512
  %s499 = scalar_lea.vmem %s4, %s498
  %vm500 = vcmask 64512
  %501 = vst.msk [vmem:[%s499] sm:$0xff] %vm500, %v307
  %502 = vst.msk [vmem:[%s499 + $0x8] sm:$0xff] %vm500, %v310
  %503 = vst.msk [vmem:[%s499 + $0x10] sm:$0xff] %vm500, %v313
  %504 = vst.msk [vmem:[%s499 + $0x18] sm:$0xff] %vm500, %v316
  %505 = vst.msk [vmem:[%s499 + $0x20] sm:$0xff] %vm500, %v319
  %506 = vst.msk [vmem:[%s499 + $0x28] sm:$0xff] %vm500, %v322
  %507 = vst.msk [vmem:[%s499 + $0x30] sm:$0xff] %vm500, %v325
  %508 = vst.msk [vmem:[%s499 + $0x38] sm:$0xff] %vm500, %v328
  %509 = vst.msk [vmem:[%s499 + $0x40] sm:$0xff] %vm500, %v331
  %510 = vst.msk [vmem:[%s499 + $0x48] sm:$0xff] %vm500, %v334
  %511 = vst.msk [vmem:[%s499 + $0x50] sm:$0xff] %vm500, %v337
  %512 = vst.msk [vmem:[%s499 + $0x58] sm:$0xff] %vm500, %v340
  %513 = vst.msk [vmem:[%s499 + $0x60] sm:$0xff] %vm500, %v343
  %514 = vst.msk [vmem:[%s499 + $0x68] sm:$0xff] %vm500, %v346
  %515 = vst.msk [vmem:[%s499 + $0x70] sm:$0xff] %vm500, %v349
  %516 = vst.msk [vmem:[%s499 + $0x78] sm:$0xff] %vm500, %v352
  %517 = vst.msk [vmem:[%s499 + $0x80] sm:$0xff] %vm500, %v355
  %518 = vst.msk [vmem:[%s499 + $0x88] sm:$0xff] %vm500, %v358
  %519 = vst.msk [vmem:[%s499 + $0x90] sm:$0xff] %vm500, %v361
  %520 = vst.msk [vmem:[%s499 + $0x98] sm:$0xff] %vm500, %v364
  %521 = vst.msk [vmem:[%s499 + $0xa0] sm:$0xff] %vm500, %v367
  %522 = vst.msk [vmem:[%s499 + $0xa8] sm:$0xff] %vm500, %v370
  %523 = vst.msk [vmem:[%s499 + $0xb0] sm:$0xff] %vm500, %v373
  %524 = vst.msk [vmem:[%s499 + $0xb8] sm:$0xff] %vm500, %v376
  %525 = vst.msk [vmem:[%s499 + $0xc0] sm:$0xff] %vm500, %v379
  %526 = vst.msk [vmem:[%s499 + $0xc8] sm:$0xff] %vm500, %v382
  %527 = vst.msk [vmem:[%s499 + $0xd0] sm:$0xff] %vm500, %v385
  %528 = vst.msk [vmem:[%s499 + $0xd8] sm:$0xff] %vm500, %v388
  %529 = vst.msk [vmem:[%s499 + $0xe0] sm:$0xff] %vm500, %v391
  %530 = vst.msk [vmem:[%s499 + $0xe8] sm:$0xff] %vm500, %v394
  %531 = vst.msk [vmem:[%s499 + $0xf0] sm:$0xff] %vm500, %v397
  %532 = vst.msk [vmem:[%s499 + $0xf8] sm:$0xff] %vm500, %v400
  %533 = vst.msk [vmem:[%s499 + $0x100] sm:$0xff] %vm500, %v403
  %534 = vst.msk [vmem:[%s499 + $0x108] sm:$0xff] %vm500, %v406
  %535 = vst.msk [vmem:[%s499 + $0x110] sm:$0xff] %vm500, %v409
  %536 = vst.msk [vmem:[%s499 + $0x118] sm:$0xff] %vm500, %v412
  %537 = vst.msk [vmem:[%s499 + $0x120] sm:$0xff] %vm500, %v415
  %538 = vst.msk [vmem:[%s499 + $0x128] sm:$0xff] %vm500, %v418
  %539 = vst.msk [vmem:[%s499 + $0x130] sm:$0xff] %vm500, %v421
  %540 = vst.msk [vmem:[%s499 + $0x138] sm:$0xff] %vm500, %v424
  %541 = vst.msk [vmem:[%s499 + $0x140] sm:$0xff] %vm500, %v427
  %542 = vst.msk [vmem:[%s499 + $0x148] sm:$0xff] %vm500, %v430
  %543 = vst.msk [vmem:[%s499 + $0x150] sm:$0xff] %vm500, %v433
  %544 = vst.msk [vmem:[%s499 + $0x158] sm:$0xff] %vm500, %v436
  %545 = vst.msk [vmem:[%s499 + $0x160] sm:$0xff] %vm500, %v439
  %546 = vst.msk [vmem:[%s499 + $0x168] sm:$0xff] %vm500, %v442
  %547 = vst.msk [vmem:[%s499 + $0x170] sm:$0xff] %vm500, %v445
  %548 = vst.msk [vmem:[%s499 + $0x178] sm:$0xff] %vm500, %v448
  %549 = vst.msk [vmem:[%s499 + $0x180] sm:$0xff] %vm500, %v451
  %550 = vst.msk [vmem:[%s499 + $0x188] sm:$0xff] %vm500, %v454
  %551 = vst.msk [vmem:[%s499 + $0x190] sm:$0xff] %vm500, %v457
  %552 = vst.msk [vmem:[%s499 + $0x198] sm:$0xff] %vm500, %v460
  %553 = vst.msk [vmem:[%s499 + $0x1a0] sm:$0xff] %vm500, %v463
  %554 = vst.msk [vmem:[%s499 + $0x1a8] sm:$0xff] %vm500, %v466
  %555 = vst.msk [vmem:[%s499 + $0x1b0] sm:$0xff] %vm500, %v469
  %556 = vst.msk [vmem:[%s499 + $0x1b8] sm:$0xff] %vm500, %v472
  %557 = vst.msk [vmem:[%s499 + $0x1c0] sm:$0xff] %vm500, %v475
  %558 = vst.msk [vmem:[%s499 + $0x1c8] sm:$0xff] %vm500, %v478
  %559 = vst.msk [vmem:[%s499 + $0x1d0] sm:$0xff] %vm500, %v481
  %560 = vst.msk [vmem:[%s499 + $0x1d8] sm:$0xff] %vm500, %v484
  %561 = vst.msk [vmem:[%s499 + $0x1e0] sm:$0xff] %vm500, %v487
  %562 = vst.msk [vmem:[%s499 + $0x1e8] sm:$0xff] %vm500, %v490
  %563 = vst.msk [vmem:[%s499 + $0x1f0] sm:$0xff] %vm500, %v493
  %564 = vst.msk [vmem:[%s499 + $0x1f8] sm:$0xff] %vm500, %v496
  %v565 = vld [vmem:[#allocation2] sm:$0x1]
  %v566 = vsel %vm500, %v307, 0.0
  %v567 = vsel %vm500, %v310, 0.0
  %v568 = vadd.f32 %v566, %v567
  %v569 = vsel %vm500, %v313, 0.0
  %v570 = vadd.f32 %v568, %v569
  %v571 = vsel %vm500, %v316, 0.0
  %v572 = vadd.f32 %v570, %v571
  %v573 = vsel %vm500, %v319, 0.0
  %v574 = vadd.f32 %v572, %v573
  %v575 = vsel %vm500, %v322, 0.0
  %v576 = vadd.f32 %v574, %v575
  %v577 = vsel %vm500, %v325, 0.0
  %v578 = vadd.f32 %v576, %v577
  %v579 = vsel %vm500, %v328, 0.0
  %v580 = vadd.f32 %v578, %v579
  %v581 = vsel %vm500, %v331, 0.0
  %v582 = vadd.f32 %v580, %v581
  %v583 = vsel %vm500, %v334, 0.0
  %v584 = vadd.f32 %v582, %v583
  %v585 = vsel %vm500, %v337, 0.0
  %v586 = vadd.f32 %v584, %v585
  %v587 = vsel %vm500, %v340, 0.0
  %v588 = vadd.f32 %v586, %v587
  %v589 = vsel %vm500, %v343, 0.0
  %v590 = vadd.f32 %v588, %v589
  %v591 = vsel %vm500, %v346, 0.0
  %v592 = vadd.f32 %v590, %v591
  %v593 = vsel %vm500, %v349, 0.0
  %v594 = vadd.f32 %v592, %v593
  %v595 = vsel %vm500, %v352, 0.0
  %v596 = vadd.f32 %v594, %v595
  %v597 = vsel %vm500, %v355, 0.0
  %v598 = vadd.f32 %v596, %v597
  %v599 = vsel %vm500, %v358, 0.0
  %v600 = vadd.f32 %v598, %v599
  %v601 = vsel %vm500, %v361, 0.0
  %v602 = vadd.f32 %v600, %v601
  %v603 = vsel %vm500, %v364, 0.0
  %v604 = vadd.f32 %v602, %v603
  %v605 = vsel %vm500, %v367, 0.0
  %v606 = vadd.f32 %v604, %v605
  %v607 = vsel %vm500, %v370, 0.0
  %v608 = vadd.f32 %v606, %v607
  %v609 = vsel %vm500, %v373, 0.0
  %v610 = vadd.f32 %v608, %v609
  %v611 = vsel %vm500, %v376, 0.0
  %v612 = vadd.f32 %v610, %v611
  %v613 = vsel %vm500, %v379, 0.0
  %v614 = vadd.f32 %v612, %v613
  %v615 = vsel %vm500, %v382, 0.0
  %v616 = vadd.f32 %v614, %v615
  %v617 = vsel %vm500, %v385, 0.0
  %v618 = vadd.f32 %v616, %v617
  %v619 = vsel %vm500, %v388, 0.0
  %v620 = vadd.f32 %v618, %v619
  %v621 = vsel %vm500, %v391, 0.0
  %v622 = vadd.f32 %v620, %v621
  %v623 = vsel %vm500, %v394, 0.0
  %v624 = vadd.f32 %v622, %v623
  %v625 = vsel %vm500, %v397, 0.0
  %v626 = vadd.f32 %v624, %v625
  %v627 = vsel %vm500, %v400, 0.0
  %v628 = vadd.f32 %v626, %v627
  %v629 = vsel %vm500, %v403, 0.0
  %v630 = vadd.f32 %v628, %v629
  %v631 = vsel %vm500, %v406, 0.0
  %v632 = vadd.f32 %v630, %v631
  %v633 = vsel %vm500, %v409, 0.0
  %v634 = vadd.f32 %v632, %v633
  %v635 = vsel %vm500, %v412, 0.0
  %v636 = vadd.f32 %v634, %v635
  %v637 = vsel %vm500, %v415, 0.0
  %v638 = vadd.f32 %v636, %v637
  %v639 = vsel %vm500, %v418, 0.0
  %v640 = vadd.f32 %v638, %v639
  %v641 = vsel %vm500, %v421, 0.0
  %v642 = vadd.f32 %v640, %v641
  %v643 = vsel %vm500, %v424, 0.0
  %v644 = vadd.f32 %v642, %v643
  %v645 = vsel %vm500, %v427, 0.0
  %v646 = vadd.f32 %v644, %v645
  %v647 = vsel %vm500, %v430, 0.0
  %v648 = vadd.f32 %v646, %v647
  %v649 = vsel %vm500, %v433, 0.0
  %v650 = vadd.f32 %v648, %v649
  %v651 = vsel %vm500, %v436, 0.0
  %v652 = vadd.f32 %v650, %v651
  %v653 = vsel %vm500, %v439, 0.0
  %v654 = vadd.f32 %v652, %v653
  %v655 = vsel %vm500, %v442, 0.0
  %v656 = vadd.f32 %v654, %v655
  %v657 = vsel %vm500, %v445, 0.0
  %v658 = vadd.f32 %v656, %v657
  %v659 = vsel %vm500, %v448, 0.0
  %v660 = vadd.f32 %v658, %v659
  %v661 = vsel %vm500, %v451, 0.0
  %v662 = vadd.f32 %v660, %v661
  %v663 = vsel %vm500, %v454, 0.0
  %v664 = vadd.f32 %v662, %v663
  %v665 = vsel %vm500, %v457, 0.0
  %v666 = vadd.f32 %v664, %v665
  %v667 = vsel %vm500, %v460, 0.0
  %v668 = vadd.f32 %v666, %v667
  %v669 = vsel %vm500, %v463, 0.0
  %v670 = vadd.f32 %v668, %v669
  %v671 = vsel %vm500, %v466, 0.0
  %v672 = vadd.f32 %v670, %v671
  %v673 = vsel %vm500, %v469, 0.0
  %v674 = vadd.f32 %v672, %v673
  %v675 = vsel %vm500, %v472, 0.0
  %v676 = vadd.f32 %v674, %v675
  %v677 = vsel %vm500, %v475, 0.0
  %v678 = vadd.f32 %v676, %v677
  %v679 = vsel %vm500, %v478, 0.0
  %v680 = vadd.f32 %v678, %v679
  %v681 = vsel %vm500, %v481, 0.0
  %v682 = vadd.f32 %v680, %v681
  %v683 = vsel %vm500, %v484, 0.0
  %v684 = vadd.f32 %v682, %v683
  %v685 = vsel %vm500, %v487, 0.0
  %v686 = vadd.f32 %v684, %v685
  %v687 = vsel %vm500, %v490, 0.0
  %v688 = vadd.f32 %v686, %v687
  %v689 = vsel %vm500, %v493, 0.0
  %v690 = vadd.f32 %v688, %v689
  %v691 = vsel %vm500, %v496, 0.0
  %v692 = vadd.f32 %v690, %v691
  %v693 = vrot.slane %v692, 4
  %v694 = vadd.f32 %v692, %v693
  %v695 = vrot.slane %v694, 2
  %v696 = vadd.f32 %v694, %v695
  %v697 = vrot.slane %v696, 1
  %v698 = vadd.f32 %v696, %v697
  %v699 = vadd.f32 %v565, %v698
  %vm700 = vcmask 57344
  %701 = vst.msk [vmem:[#allocation2] sm:$0x1] %vm700, %v699
  %v702 = vld [vmem:[#allocation2 + $0x1] sm:$0x1]
  %v703 = vmul.f32 %v307, %v307
  %v704 = vmul.f32 %v310, %v310
  %v705 = vmul.f32 %v313, %v313
  %v706 = vmul.f32 %v316, %v316
  %v707 = vmul.f32 %v319, %v319
  %v708 = vmul.f32 %v322, %v322
  %v709 = vmul.f32 %v325, %v325
  %v710 = vmul.f32 %v328, %v328
  %v711 = vmul.f32 %v331, %v331
  %v712 = vmul.f32 %v334, %v334
  %v713 = vmul.f32 %v337, %v337
  %v714 = vmul.f32 %v340, %v340
  %v715 = vmul.f32 %v343, %v343
  %v716 = vmul.f32 %v346, %v346
  %v717 = vmul.f32 %v349, %v349
  %v718 = vmul.f32 %v352, %v352
  %v719 = vmul.f32 %v355, %v355
  %v720 = vmul.f32 %v358, %v358
  %v721 = vmul.f32 %v361, %v361
  %v722 = vmul.f32 %v364, %v364
  %v723 = vmul.f32 %v367, %v367
  %v724 = vmul.f32 %v370, %v370
  %v725 = vmul.f32 %v373, %v373
  %v726 = vmul.f32 %v376, %v376
  %v727 = vmul.f32 %v379, %v379
  %v728 = vmul.f32 %v382, %v382
  %v729 = vmul.f32 %v385, %v385
  %v730 = vmul.f32 %v388, %v388
  %v731 = vmul.f32 %v391, %v391
  %v732 = vmul.f32 %v394, %v394
  %v733 = vmul.f32 %v397, %v397
  %v734 = vmul.f32 %v400, %v400
  %v735 = vmul.f32 %v403, %v403
  %v736 = vmul.f32 %v406, %v406
  %v737 = vmul.f32 %v409, %v409
  %v738 = vmul.f32 %v412, %v412
  %v739 = vmul.f32 %v415, %v415
  %v740 = vmul.f32 %v418, %v418
  %v741 = vmul.f32 %v421, %v421
  %v742 = vmul.f32 %v424, %v424
  %v743 = vmul.f32 %v427, %v427
  %v744 = vmul.f32 %v430, %v430
  %v745 = vmul.f32 %v433, %v433
  %v746 = vmul.f32 %v436, %v436
  %v747 = vmul.f32 %v439, %v439
  %v748 = vmul.f32 %v442, %v442
  %v749 = vmul.f32 %v445, %v445
  %v750 = vmul.f32 %v448, %v448
  %v751 = vmul.f32 %v451, %v451
  %v752 = vmul.f32 %v454, %v454
  %v753 = vmul.f32 %v457, %v457
  %v754 = vmul.f32 %v460, %v460
  %v755 = vmul.f32 %v463, %v463
  %v756 = vmul.f32 %v466, %v466
  %v757 = vmul.f32 %v469, %v469
  %v758 = vmul.f32 %v472, %v472
  %v759 = vmul.f32 %v475, %v475
  %v760 = vmul.f32 %v478, %v478
  %v761 = vmul.f32 %v481, %v481
  %v762 = vmul.f32 %v484, %v484
  %v763 = vmul.f32 %v487, %v487
  %v764 = vmul.f32 %v490, %v490
  %v765 = vmul.f32 %v493, %v493
  %v766 = vmul.f32 %v496, %v496
  %v767 = vsel %vm500, %v703, 0.0
  %v768 = vsel %vm500, %v704, 0.0
  %v769 = vadd.f32 %v767, %v768
  %v770 = vsel %vm500, %v705, 0.0
  %v771 = vadd.f32 %v769, %v770
  %v772 = vsel %vm500, %v706, 0.0
  %v773 = vadd.f32 %v771, %v772
  %v774 = vsel %vm500, %v707, 0.0
  %v775 = vadd.f32 %v773, %v774
  %v776 = vsel %vm500, %v708, 0.0
  %v777 = vadd.f32 %v775, %v776
  %v778 = vsel %vm500, %v709, 0.0
  %v779 = vadd.f32 %v777, %v778
  %v780 = vsel %vm500, %v710, 0.0
  %v781 = vadd.f32 %v779, %v780
  %v782 = vsel %vm500, %v711, 0.0
  %v783 = vadd.f32 %v781, %v782
  %v784 = vsel %vm500, %v712, 0.0
  %v785 = vadd.f32 %v783, %v784
  %v786 = vsel %vm500, %v713, 0.0
  %v787 = vadd.f32 %v785, %v786
  %v788 = vsel %vm500, %v714, 0.0
  %v789 = vadd.f32 %v787, %v788
  %v790 = vsel %vm500, %v715, 0.0
  %v791 = vadd.f32 %v789, %v790
  %v792 = vsel %vm500, %v716, 0.0
  %v793 = vadd.f32 %v791, %v792
  %v794 = vsel %vm500, %v717, 0.0
  %v795 = vadd.f32 %v793, %v794
  %v796 = vsel %vm500, %v718, 0.0
  %v797 = vadd.f32 %v795, %v796
  %v798 = vsel %vm500, %v719, 0.0
  %v799 = vadd.f32 %v797, %v798
  %v800 = vsel %vm500, %v720, 0.0
  %v801 = vadd.f32 %v799, %v800
  %v802 = vsel %vm500, %v721, 0.0
  %v803 = vadd.f32 %v801, %v802
  %v804 = vsel %vm500, %v722, 0.0
  %v805 = vadd.f32 %v803, %v804
  %v806 = vsel %vm500, %v723, 0.0
  %v807 = vadd.f32 %v805, %v806
  %v808 = vsel %vm500, %v724, 0.0
  %v809 = vadd.f32 %v807, %v808
  %v810 = vsel %vm500, %v725, 0.0
  %v811 = vadd.f32 %v809, %v810
  %v812 = vsel %vm500, %v726, 0.0
  %v813 = vadd.f32 %v811, %v812
  %v814 = vsel %vm500, %v727, 0.0
  %v815 = vadd.f32 %v813, %v814
  %v816 = vsel %vm500, %v728, 0.0
  %v817 = vadd.f32 %v815, %v816
  %v818 = vsel %vm500, %v729, 0.0
  %v819 = vadd.f32 %v817, %v818
  %v820 = vsel %vm500, %v730, 0.0
  %v821 = vadd.f32 %v819, %v820
  %v822 = vsel %vm500, %v731, 0.0
  %v823 = vadd.f32 %v821, %v822
  %v824 = vsel %vm500, %v732, 0.0
  %v825 = vadd.f32 %v823, %v824
  %v826 = vsel %vm500, %v733, 0.0
  %v827 = vadd.f32 %v825, %v826
  %v828 = vsel %vm500, %v734, 0.0
  %v829 = vadd.f32 %v827, %v828
  %v830 = vsel %vm500, %v735, 0.0
  %v831 = vadd.f32 %v829, %v830
  %v832 = vsel %vm500, %v736, 0.0
  %v833 = vadd.f32 %v831, %v832
  %v834 = vsel %vm500, %v737, 0.0
  %v835 = vadd.f32 %v833, %v834
  %v836 = vsel %vm500, %v738, 0.0
  %v837 = vadd.f32 %v835, %v836
  %v838 = vsel %vm500, %v739, 0.0
  %v839 = vadd.f32 %v837, %v838
  %v840 = vsel %vm500, %v740, 0.0
  %v841 = vadd.f32 %v839, %v840
  %v842 = vsel %vm500, %v741, 0.0
  %v843 = vadd.f32 %v841, %v842
  %v844 = vsel %vm500, %v742, 0.0
  %v845 = vadd.f32 %v843, %v844
  %v846 = vsel %vm500, %v743, 0.0
  %v847 = vadd.f32 %v845, %v846
  %v848 = vsel %vm500, %v744, 0.0
  %v849 = vadd.f32 %v847, %v848
  %v850 = vsel %vm500, %v745, 0.0
  %v851 = vadd.f32 %v849, %v850
  %v852 = vsel %vm500, %v746, 0.0
  %v853 = vadd.f32 %v851, %v852
  %v854 = vsel %vm500, %v747, 0.0
  %v855 = vadd.f32 %v853, %v854
  %v856 = vsel %vm500, %v748, 0.0
  %v857 = vadd.f32 %v855, %v856
  %v858 = vsel %vm500, %v749, 0.0
  %v859 = vadd.f32 %v857, %v858
  %v860 = vsel %vm500, %v750, 0.0
  %v861 = vadd.f32 %v859, %v860
  %v862 = vsel %vm500, %v751, 0.0
  %v863 = vadd.f32 %v861, %v862
  %v864 = vsel %vm500, %v752, 0.0
  %v865 = vadd.f32 %v863, %v864
  %v866 = vsel %vm500, %v753, 0.0
  %v867 = vadd.f32 %v865, %v866
  %v868 = vsel %vm500, %v754, 0.0
  %v869 = vadd.f32 %v867, %v868
  %v870 = vsel %vm500, %v755, 0.0
  %v871 = vadd.f32 %v869, %v870
  %v872 = vsel %vm500, %v756, 0.0
  %v873 = vadd.f32 %v871, %v872
  %v874 = vsel %vm500, %v757, 0.0
  %v875 = vadd.f32 %v873, %v874
  %v876 = vsel %vm500, %v758, 0.0
  %v877 = vadd.f32 %v875, %v876
  %v878 = vsel %vm500, %v759, 0.0
  %v879 = vadd.f32 %v877, %v878
  %v880 = vsel %vm500, %v760, 0.0
  %v881 = vadd.f32 %v879, %v880
  %v882 = vsel %vm500, %v761, 0.0
  %v883 = vadd.f32 %v881, %v882
  %v884 = vsel %vm500, %v762, 0.0
  %v885 = vadd.f32 %v883, %v884
  %v886 = vsel %vm500, %v763, 0.0
  %v887 = vadd.f32 %v885, %v886
  %v888 = vsel %vm500, %v764, 0.0
  %v889 = vadd.f32 %v887, %v888
  %v890 = vsel %vm500, %v765, 0.0
  %v891 = vadd.f32 %v889, %v890
  %v892 = vsel %vm500, %v766, 0.0
  %v893 = vadd.f32 %v891, %v892
  %v894 = vrot.slane %v893, 4
  %v895 = vadd.f32 %v893, %v894
  %v896 = vrot.slane %v895, 2
  %v897 = vadd.f32 %v895, %v896
  %v898 = vrot.slane %v897, 1
  %v899 = vadd.f32 %v897, %v898
  %v900 = vadd.f32 %v702, %v899
  %901 = vst.msk [vmem:[#allocation2 + $0x1] sm:$0x1] %vm700, %v900
  // Predicated region
  $region22: #{down_block_forward.1} parent=0 // pred_check
    %p902 = pneg %p17
  $region23: #{down_block_forward.1} parent=0 // pred_check_branch
    %904 = sbr.rel (%p902) target = $region25
  $region24: #{down_block_forward.1} parent=0 // pred_region
    %v905 = vld [vmem:[#allocation2] sm:$0x1]
    %v906 = vmul.f32 %v905, 0.001953125
    %v907 = vld [vmem:[#allocation2 + $0x1] sm:$0x1]
    %v908 = vmul.f32 %v907, 0.001953125
    %v909 = vmul.f32 %v906, %v906
    %v910 = vsub.f32 %v908, %v909
    %v911 = vld [vmem:[%s2] sm:$0x1]
    %v912 = vadd.f32 %v910, 1e-05
    %v913 = vrsqrt.pop %v912
    %v914 = vmul.f32 %v913, %v912
    %v915 = vmul.f32 %v914, %v913
    %v916 = vmul.f32 0.5, %v915
    %v917 = vsub.f32 1.5, %v916
    %v918 = vmul.f32 %v913, %v917
    %vm919 = vweird.f32 %v912
    %vm920 = vweird.f32 %v913
    %vm921 = vmor %vm919, %vm920
    %v922 = vsel %vm921, %v913, %v918
    %v923 = vmul.f32 %v911, %v922
    %v924 = vld [vmem:[%s3] sm:$0x1]
    %v925 = vmul.f32 %v906, %v923
    %v926 = vsub.f32 %v924, %v925
    %v927 = vld [vmem:[%s4] sm:$0xff]
    %v928 = vld [vmem:[%s4 + $0x8] sm:$0xff]
    %v929 = vld [vmem:[%s4 + $0x10] sm:$0xff]
    %v930 = vld [vmem:[%s4 + $0x18] sm:$0xff]
    %v931 = vld [vmem:[%s4 + $0x20] sm:$0xff]
    %v932 = vld [vmem:[%s4 + $0x28] sm:$0xff]
    %v933 = vld [vmem:[%s4 + $0x30] sm:$0xff]
    %v934 = vld [vmem:[%s4 + $0x38] sm:$0xff]
    %v935 = vld [vmem:[%s4 + $0x40] sm:$0xff]
    %v936 = vld [vmem:[%s4 + $0x48] sm:$0xff]
    %v937 = vld [vmem:[%s4 + $0x50] sm:$0xff]
    %v938 = vld [vmem:[%s4 + $0x58] sm:$0xff]
    %v939 = vld [vmem:[%s4 + $0x60] sm:$0xff]
    %v940 = vld [vmem:[%s4 + $0x68] sm:$0xff]
    %v941 = vld [vmem:[%s4 + $0x70] sm:$0xff]
    %v942 = vld [vmem:[%s4 + $0x78] sm:$0xff]
    %v943 = vld [vmem:[%s4 + $0x80] sm:$0xff]
    %v944 = vld [vmem:[%s4 + $0x88] sm:$0xff]
    %v945 = vld [vmem:[%s4 + $0x90] sm:$0xff]
    %v946 = vld [vmem:[%s4 + $0x98] sm:$0xff]
    %v947 = vld [vmem:[%s4 + $0xa0] sm:$0xff]
    %v948 = vld [vmem:[%s4 + $0xa8] sm:$0xff]
    %v949 = vld [vmem:[%s4 + $0xb0] sm:$0xff]
    %v950 = vld [vmem:[%s4 + $0xb8] sm:$0xff]
    %v951 = vld [vmem:[%s4 + $0xc0] sm:$0xff]
    %v952 = vld [vmem:[%s4 + $0xc8] sm:$0xff]
    %v953 = vld [vmem:[%s4 + $0xd0] sm:$0xff]
    %v954 = vld [vmem:[%s4 + $0xd8] sm:$0xff]
    %v955 = vld [vmem:[%s4 + $0xe0] sm:$0xff]
    %v956 = vld [vmem:[%s4 + $0xe8] sm:$0xff]
    %v957 = vld [vmem:[%s4 + $0xf0] sm:$0xff]
    %v958 = vld [vmem:[%s4 + $0xf8] sm:$0xff]
    %v959 = vld [vmem:[%s4 + $0x100] sm:$0xff]
    %v960 = vld [vmem:[%s4 + $0x108] sm:$0xff]
    %v961 = vld [vmem:[%s4 + $0x110] sm:$0xff]
    %v962 = vld [vmem:[%s4 + $0x118] sm:$0xff]
    %v963 = vld [vmem:[%s4 + $0x120] sm:$0xff]
    %v964 = vld [vmem:[%s4 + $0x128] sm:$0xff]
    %v965 = vld [vmem:[%s4 + $0x130] sm:$0xff]
    %v966 = vld [vmem:[%s4 + $0x138] sm:$0xff]
    %v967 = vld [vmem:[%s4 + $0x140] sm:$0xff]
    %v968 = vld [vmem:[%s4 + $0x148] sm:$0xff]
    %v969 = vld [vmem:[%s4 + $0x150] sm:$0xff]
    %v970 = vld [vmem:[%s4 + $0x158] sm:$0xff]
    %v971 = vld [vmem:[%s4 + $0x160] sm:$0xff]
    %v972 = vld [vmem:[%s4 + $0x168] sm:$0xff]
    %v973 = vld [vmem:[%s4 + $0x170] sm:$0xff]
    %v974 = vld [vmem:[%s4 + $0x178] sm:$0xff]
    %v975 = vld [vmem:[%s4 + $0x180] sm:$0xff]
    %v976 = vld [vmem:[%s4 + $0x188] sm:$0xff]
    %v977 = vld [vmem:[%s4 + $0x190] sm:$0xff]
    %v978 = vld [vmem:[%s4 + $0x198] sm:$0xff]
    %v979 = vld [vmem:[%s4 + $0x1a0] sm:$0xff]
    %v980 = vld [vmem:[%s4 + $0x1a8] sm:$0xff]
    %v981 = vld [vmem:[%s4 + $0x1b0] sm:$0xff]
    %v982 = vld [vmem:[%s4 + $0x1b8] sm:$0xff]
    %v983 = vld [vmem:[%s4 + $0x1c0] sm:$0xff]
    %v984 = vld [vmem:[%s4 + $0x1c8] sm:$0xff]
    %v985 = vld [vmem:[%s4 + $0x1d0] sm:$0xff]
    %v986 = vld [vmem:[%s4 + $0x1d8] sm:$0xff]
    %v987 = vld [vmem:[%s4 + $0x1e0] sm:$0xff]
    %v988 = vld [vmem:[%s4 + $0x1e8] sm:$0xff]
    %v989 = vld [vmem:[%s4 + $0x1f0] sm:$0xff]
    %v990 = vld [vmem:[%s4 + $0x1f8] sm:$0xff]
    %v992 = vperm.slane %v923, 0
    %v994 = vmul.f32 %v927, %v992
    %v995 = vmul.f32 %v928, %v992
    %v996 = vmul.f32 %v929, %v992
    %v997 = vmul.f32 %v930, %v992
    %v998 = vmul.f32 %v931, %v992
    %v999 = vmul.f32 %v932, %v992
    %v1000 = vmul.f32 %v933, %v992
    %v1001 = vmul.f32 %v934, %v992
    %v1002 = vmul.f32 %v935, %v992
    %v1003 = vmul.f32 %v936, %v992
    %v1004 = vmul.f32 %v937, %v992
    %v1005 = vmul.f32 %v938, %v992
    %v1006 = vmul.f32 %v939, %v992
    %v1007 = vmul.f32 %v940, %v992
    %v1008 = vmul.f32 %v941, %v992
    %v1009 = vmul.f32 %v942, %v992
    %v1010 = vmul.f32 %v943, %v992
    %v1011 = vmul.f32 %v944, %v992
    %v1012 = vmul.f32 %v945, %v992
    %v1013 = vmul.f32 %v946, %v992
    %v1014 = vmul.f32 %v947, %v992
    %v1015 = vmul.f32 %v948, %v992
    %v1016 = vmul.f32 %v949, %v992
    %v1017 = vmul.f32 %v950, %v992
    %v1018 = vmul.f32 %v951, %v992
    %v1019 = vmul.f32 %v952, %v992
    %v1020 = vmul.f32 %v953, %v992
    %v1021 = vmul.f32 %v954, %v992
    %v1022 = vmul.f32 %v955, %v992
    %v1023 = vmul.f32 %v956, %v992
    %v1024 = vmul.f32 %v957, %v992
    %v1025 = vmul.f32 %v958, %v992
    %v1026 = vmul.f32 %v959, %v992
    %v1027 = vmul.f32 %v960, %v992
    %v1028 = vmul.f32 %v961, %v992
    %v1029 = vmul.f32 %v962, %v992
    %v1030 = vmul.f32 %v963, %v992
    %v1031 = vmul.f32 %v964, %v992
    %v1032 = vmul.f32 %v965, %v992
    %v1033 = vmul.f32 %v966, %v992
    %v1034 = vmul.f32 %v967, %v992
    %v1035 = vmul.f32 %v968, %v992
    %v1036 = vmul.f32 %v969, %v992
    %v1037 = vmul.f32 %v970, %v992
    %v1038 = vmul.f32 %v971, %v992
    %v1039 = vmul.f32 %v972, %v992
    %v1040 = vmul.f32 %v973, %v992
    %v1041 = vmul.f32 %v974, %v992
    %v1042 = vmul.f32 %v975, %v992
    %v1043 = vmul.f32 %v976, %v992
    %v1044 = vmul.f32 %v977, %v992
    %v1045 = vmul.f32 %v978, %v992
    %v1046 = vmul.f32 %v979, %v992
    %v1047 = vmul.f32 %v980, %v992
    %v1048 = vmul.f32 %v981, %v992
    %v1049 = vmul.f32 %v982, %v992
    %v1050 = vmul.f32 %v983, %v992
    %v1051 = vmul.f32 %v984, %v992
    %v1052 = vmul.f32 %v985, %v992
    %v1053 = vmul.f32 %v986, %v992
    %v1054 = vmul.f32 %v987, %v992
    %v1055 = vmul.f32 %v988, %v992
    %v1056 = vmul.f32 %v989, %v992
    %v1057 = vmul.f32 %v990, %v992
    %v1059 = vperm.slane %v926, 0
    %v1061 = vadd.f32 %v994, %v1059
    %v1062 = vadd.f32 %v995, %v1059
    %v1063 = vadd.f32 %v996, %v1059
    %v1064 = vadd.f32 %v997, %v1059
    %v1065 = vadd.f32 %v998, %v1059
    %v1066 = vadd.f32 %v999, %v1059
    %v1067 = vadd.f32 %v1000, %v1059
    %v1068 = vadd.f32 %v1001, %v1059
    %v1069 = vadd.f32 %v1002, %v1059
    %v1070 = vadd.f32 %v1003, %v1059
    %v1071 = vadd.f32 %v1004, %v1059
    %v1072 = vadd.f32 %v1005, %v1059
    %v1073 = vadd.f32 %v1006, %v1059
    %v1074 = vadd.f32 %v1007, %v1059
    %v1075 = vadd.f32 %v1008, %v1059
    %v1076 = vadd.f32 %v1009, %v1059
    %v1077 = vadd.f32 %v1010, %v1059
    %v1078 = vadd.f32 %v1011, %v1059
    %v1079 = vadd.f32 %v1012, %v1059
    %v1080 = vadd.f32 %v1013, %v1059
    %v1081 = vadd.f32 %v1014, %v1059
    %v1082 = vadd.f32 %v1015, %v1059
    %v1083 = vadd.f32 %v1016, %v1059
    %v1084 = vadd.f32 %v1017, %v1059
    %v1085 = vadd.f32 %v1018, %v1059
    %v1086 = vadd.f32 %v1019, %v1059
    %v1087 = vadd.f32 %v1020, %v1059
    %v1088 = vadd.f32 %v1021, %v1059
    %v1089 = vadd.f32 %v1022, %v1059
    %v1090 = vadd.f32 %v1023, %v1059
    %v1091 = vadd.f32 %v1024, %v1059
    %v1092 = vadd.f32 %v1025, %v1059
    %v1093 = vadd.f32 %v1026, %v1059
    %v1094 = vadd.f32 %v1027, %v1059
    %v1095 = vadd.f32 %v1028, %v1059
    %v1096 = vadd.f32 %v1029, %v1059
    %v1097 = vadd.f32 %v1030, %v1059
    %v1098 = vadd.f32 %v1031, %v1059
    %v1099 = vadd.f32 %v1032, %v1059
    %v1100 = vadd.f32 %v1033, %v1059
    %v1101 = vadd.f32 %v1034, %v1059
    %v1102 = vadd.f32 %v1035, %v1059
    %v1103 = vadd.f32 %v1036, %v1059
    %v1104 = vadd.f32 %v1037, %v1059
    %v1105 = vadd.f32 %v1038, %v1059
    %v1106 = vadd.f32 %v1039, %v1059
    %v1107 = vadd.f32 %v1040, %v1059
    %v1108 = vadd.f32 %v1041, %v1059
    %v1109 = vadd.f32 %v1042, %v1059
    %v1110 = vadd.f32 %v1043, %v1059
    %v1111 = vadd.f32 %v1044, %v1059
    %v1112 = vadd.f32 %v1045, %v1059
    %v1113 = vadd.f32 %v1046, %v1059
    %v1114 = vadd.f32 %v1047, %v1059
    %v1115 = vadd.f32 %v1048, %v1059
    %v1116 = vadd.f32 %v1049, %v1059
    %v1117 = vadd.f32 %v1050, %v1059
    %v1118 = vadd.f32 %v1051, %v1059
    %v1119 = vadd.f32 %v1052, %v1059
    %v1120 = vadd.f32 %v1053, %v1059
    %v1121 = vadd.f32 %v1054, %v1059
    %v1122 = vadd.f32 %v1055, %v1059
    %v1123 = vadd.f32 %v1056, %v1059
    %v1124 = vadd.f32 %v1057, %v1059
    %v1125 = vmax.f32 %v1061, 0.0
    %v1126 = vmax.f32 %v1062, 0.0
    %v1127 = vmax.f32 %v1063, 0.0
    %v1128 = vmax.f32 %v1064, 0.0
    %v1129 = vmax.f32 %v1065, 0.0
    %v1130 = vmax.f32 %v1066, 0.0
    %v1131 = vmax.f32 %v1067, 0.0
    %v1132 = vmax.f32 %v1068, 0.0
    %v1133 = vmax.f32 %v1069, 0.0
    %v1134 = vmax.f32 %v1070, 0.0
    %v1135 = vmax.f32 %v1071, 0.0
    %v1136 = vmax.f32 %v1072, 0.0
    %v1137 = vmax.f32 %v1073, 0.0
    %v1138 = vmax.f32 %v1074, 0.0
    %v1139 = vmax.f32 %v1075, 0.0
    %v1140 = vmax.f32 %v1076, 0.0
    %v1141 = vmax.f32 %v1077, 0.0
    %v1142 = vmax.f32 %v1078, 0.0
    %v1143 = vmax.f32 %v1079, 0.0
    %v1144 = vmax.f32 %v1080, 0.0
    %v1145 = vmax.f32 %v1081, 0.0
    %v1146 = vmax.f32 %v1082, 0.0
    %v1147 = vmax.f32 %v1083, 0.0
    %v1148 = vmax.f32 %v1084, 0.0
    %v1149 = vmax.f32 %v1085, 0.0
    %v1150 = vmax.f32 %v1086, 0.0
    %v1151 = vmax.f32 %v1087, 0.0
    %v1152 = vmax.f32 %v1088, 0.0
    %v1153 = vmax.f32 %v1089, 0.0
    %v1154 = vmax.f32 %v1090, 0.0
    %v1155 = vmax.f32 %v1091, 0.0
    %v1156 = vmax.f32 %v1092, 0.0
    %v1157 = vmax.f32 %v1093, 0.0
    %v1158 = vmax.f32 %v1094, 0.0
    %v1159 = vmax.f32 %v1095, 0.0
    %v1160 = vmax.f32 %v1096, 0.0
    %v1161 = vmax.f32 %v1097, 0.0
    %v1162 = vmax.f32 %v1098, 0.0
    %v1163 = vmax.f32 %v1099, 0.0
    %v1164 = vmax.f32 %v1100, 0.0
    %v1165 = vmax.f32 %v1101, 0.0
    %v1166 = vmax.f32 %v1102, 0.0
    %v1167 = vmax.f32 %v1103, 0.0
    %v1168 = vmax.f32 %v1104, 0.0
    %v1169 = vmax.f32 %v1105, 0.0
    %v1170 = vmax.f32 %v1106, 0.0
    %v1171 = vmax.f32 %v1107, 0.0
    %v1172 = vmax.f32 %v1108, 0.0
    %v1173 = vmax.f32 %v1109, 0.0
    %v1174 = vmax.f32 %v1110, 0.0
    %v1175 = vmax.f32 %v1111, 0.0
    %v1176 = vmax.f32 %v1112, 0.0
    %v1177 = vmax.f32 %v1113, 0.0
    %v1178 = vmax.f32 %v1114, 0.0
    %v1179 = vmax.f32 %v1115, 0.0
    %v1180 = vmax.f32 %v1116, 0.0
    %v1181 = vmax.f32 %v1117, 0.0
    %v1182 = vmax.f32 %v1118, 0.0
    %v1183 = vmax.f32 %v1119, 0.0
    %v1184 = vmax.f32 %v1120, 0.0
    %v1185 = vmax.f32 %v1121, 0.0
    %v1186 = vmax.f32 %v1122, 0.0
    %v1187 = vmax.f32 %v1123, 0.0
    %v1188 = vmax.f32 %v1124, 0.0
    %1189 = vst.msk [vmem:[%s4] sm:$0xff] %vm500, %v1125
    %1190 = vst.msk [vmem:[%s4 + $0x8] sm:$0xff] %vm500, %v1126
    %1191 = vst.msk [vmem:[%s4 + $0x10] sm:$0xff] %vm500, %v1127
    %1192 = vst.msk [vmem:[%s4 + $0x18] sm:$0xff] %vm500, %v1128
    %1193 = vst.msk [vmem:[%s4 + $0x20] sm:$0xff] %vm500, %v1129
    %1194 = vst.msk [vmem:[%s4 + $0x28] sm:$0xff] %vm500, %v1130
    %1195 = vst.msk [vmem:[%s4 + $0x30] sm:$0xff] %vm500, %v1131
    %1196 = vst.msk [vmem:[%s4 + $0x38] sm:$0xff] %vm500, %v1132
    %1197 = vst.msk [vmem:[%s4 + $0x40] sm:$0xff] %vm500, %v1133
    %1198 = vst.msk [vmem:[%s4 + $0x48] sm:$0xff] %vm500, %v1134
    %1199 = vst.msk [vmem:[%s4 + $0x50] sm:$0xff] %vm500, %v1135
    %1200 = vst.msk [vmem:[%s4 + $0x58] sm:$0xff] %vm500, %v1136
    %1201 = vst.msk [vmem:[%s4 + $0x60] sm:$0xff] %vm500, %v1137
    %1202 = vst.msk [vmem:[%s4 + $0x68] sm:$0xff] %vm500, %v1138
    %1203 = vst.msk [vmem:[%s4 + $0x70] sm:$0xff] %vm500, %v1139
    %1204 = vst.msk [vmem:[%s4 + $0x78] sm:$0xff] %vm500, %v1140
    %1205 = vst.msk [vmem:[%s4 + $0x80] sm:$0xff] %vm500, %v1141
    %1206 = vst.msk [vmem:[%s4 + $0x88] sm:$0xff] %vm500, %v1142
    %1207 = vst.msk [vmem:[%s4 + $0x90] sm:$0xff] %vm500, %v1143
    %1208 = vst.msk [vmem:[%s4 + $0x98] sm:$0xff] %vm500, %v1144
    %1209 = vst.msk [vmem:[%s4 + $0xa0] sm:$0xff] %vm500, %v1145
    %1210 = vst.msk [vmem:[%s4 + $0xa8] sm:$0xff] %vm500, %v1146
    %1211 = vst.msk [vmem:[%s4 + $0xb0] sm:$0xff] %vm500, %v1147
    %1212 = vst.msk [vmem:[%s4 + $0xb8] sm:$0xff] %vm500, %v1148
    %1213 = vst.msk [vmem:[%s4 + $0xc0] sm:$0xff] %vm500, %v1149
    %1214 = vst.msk [vmem:[%s4 + $0xc8] sm:$0xff] %vm500, %v1150
    %1215 = vst.msk [vmem:[%s4 + $0xd0] sm:$0xff] %vm500, %v1151
    %1216 = vst.msk [vmem:[%s4 + $0xd8] sm:$0xff] %vm500, %v1152
    %1217 = vst.msk [vmem:[%s4 + $0xe0] sm:$0xff] %vm500, %v1153
    %1218 = vst.msk [vmem:[%s4 + $0xe8] sm:$0xff] %vm500, %v1154
    %1219 = vst.msk [vmem:[%s4 + $0xf0] sm:$0xff] %vm500, %v1155
    %1220 = vst.msk [vmem:[%s4 + $0xf8] sm:$0xff] %vm500, %v1156
    %1221 = vst.msk [vmem:[%s4 + $0x100] sm:$0xff] %vm500, %v1157
    %1222 = vst.msk [vmem:[%s4 + $0x108] sm:$0xff] %vm500, %v1158
    %1223 = vst.msk [vmem:[%s4 + $0x110] sm:$0xff] %vm500, %v1159
    %1224 = vst.msk [vmem:[%s4 + $0x118] sm:$0xff] %vm500, %v1160
    %1225 = vst.msk [vmem:[%s4 + $0x120] sm:$0xff] %vm500, %v1161
    %1226 = vst.msk [vmem:[%s4 + $0x128] sm:$0xff] %vm500, %v1162
    %1227 = vst.msk [vmem:[%s4 + $0x130] sm:$0xff] %vm500, %v1163
    %1228 = vst.msk [vmem:[%s4 + $0x138] sm:$0xff] %vm500, %v1164
    %1229 = vst.msk [vmem:[%s4 + $0x140] sm:$0xff] %vm500, %v1165
    %1230 = vst.msk [vmem:[%s4 + $0x148] sm:$0xff] %vm500, %v1166
    %1231 = vst.msk [vmem:[%s4 + $0x150] sm:$0xff] %vm500, %v1167
    %1232 = vst.msk [vmem:[%s4 + $0x158] sm:$0xff] %vm500, %v1168
    %1233 = vst.msk [vmem:[%s4 + $0x160] sm:$0xff] %vm500, %v1169
    %1234 = vst.msk [vmem:[%s4 + $0x168] sm:$0xff] %vm500, %v1170
    %1235 = vst.msk [vmem:[%s4 + $0x170] sm:$0xff] %vm500, %v1171
    %1236 = vst.msk [vmem:[%s4 + $0x178] sm:$0xff] %vm500, %v1172
    %1237 = vst.msk [vmem:[%s4 + $0x180] sm:$0xff] %vm500, %v1173
    %1238 = vst.msk [vmem:[%s4 + $0x188] sm:$0xff] %vm500, %v1174
    %1239 = vst.msk [vmem:[%s4 + $0x190] sm:$0xff] %vm500, %v1175
    %1240 = vst.msk [vmem:[%s4 + $0x198] sm:$0xff] %vm500, %v1176
    %1241 = vst.msk [vmem:[%s4 + $0x1a0] sm:$0xff] %vm500, %v1177
    %1242 = vst.msk [vmem:[%s4 + $0x1a8] sm:$0xff] %vm500, %v1178
    %1243 = vst.msk [vmem:[%s4 + $0x1b0] sm:$0xff] %vm500, %v1179
    %1244 = vst.msk [vmem:[%s4 + $0x1b8] sm:$0xff] %vm500, %v1180
    %1245 = vst.msk [vmem:[%s4 + $0x1c0] sm:$0xff] %vm500, %v1181
    %1246 = vst.msk [vmem:[%s4 + $0x1c8] sm:$0xff] %vm500, %v1182
    %1247 = vst.msk [vmem:[%s4 + $0x1d0] sm:$0xff] %vm500, %v1183
    %1248 = vst.msk [vmem:[%s4 + $0x1d8] sm:$0xff] %vm500, %v1184
    %1249 = vst.msk [vmem:[%s4 + $0x1e0] sm:$0xff] %vm500, %v1185
    %1250 = vst.msk [vmem:[%s4 + $0x1e8] sm:$0xff] %vm500, %v1186
    %1251 = vst.msk [vmem:[%s4 + $0x1f0] sm:$0xff] %vm500, %v1187
    %1252 = vst.msk [vmem:[%s4 + $0x1f8] sm:$0xff] %vm500, %v1188
  $region25: #{down_block_forward.1} parent=0 // pred_fallthru
    _
  // Predicated region
  $region26: #{down_block_forward.1} parent=0 // pred_check
    _
  $region27: #{down_block_forward.1} parent=0 // pred_check_branch
    %1254 = sbr.rel (0) target = $region29
  $region28: #{down_block_forward.1} parent=0 // pred_region
    _
  $region29: #{down_block_forward.1} parent=0 // pred_fallthru
    _
  // Predicated region
  $region30: #{down_block_forward.1} parent=0 // pred_check
    _
  $region31: #{down_block_forward.1} parent=0 // pred_check_branch
    %1256 = sbr.rel (0) target = $region33
  $region32: #{down_block_forward.1} parent=0 // pred_region
    _
  $region33: #{down_block_forward.1} parent=0 // pred_fallthru
    _

</llo_original>
